<compile_context>
chip_gen: v7x
topology: tpu7x:2x2x1
jax: 0.10.0
libtpu: 0.0.40
codegen_flags: <defaults>
</compile_context>

<pallas_src>
import functools

import jax
import jax.numpy as jnp
from jax import lax
from jax.experimental import pallas as pl
from jax.experimental.pallas import tpu as pltpu

# ---- model hyper-parameters (synthetic, deterministic) ----------------------
N_AGENTS = 4
STATE_DIM = 32
EMBED_DIM = 32
HYPERNET_LAYERS = 2
HYPERNET_EMBED = 64
BATCH = 8

# ---- packed-parameter geometry ----------------------------------------------
NE = N_AGENTS * EMBED_DIM                       # 128  (hyper_w_1 output width)
L0_ROWS = 2 * HYPERNET_EMBED + 2 * EMBED_DIM    # 192  fused layer-0 output features
L1_IN = 2 * HYPERNET_EMBED + EMBED_DIM          # 160  relu'd features feeding layer 1
L1_OUT = NE + EMBED_DIM + 1                     # 161  = |w1| + |w_final| + v
L1_OUT_PAD = ((L1_OUT + 7) // 8) * 8            # 168  sublane-aligned layer-1 block
TOTAL_ROWS = L0_ROWS + L1_OUT_PAD               # 360
assert L0_ROWS % 8 == 0 and L1_IN % 8 == 0 and TOTAL_ROWS % 8 == 0


def _qmixer_kernel(aq_ref, s_ref, w_ref, b_ref, out_ref):
    """Feature-major QMIX mixing network.

    aq_ref : (N_AGENTS, TB)       agent Q-values, batch on lanes
    s_ref  : (TB, STATE_DIM)      states, batch-major (transposed inside the dot)
    w_ref  : (TOTAL_ROWS, L1_IN)  packed weights: rows [0,192) layer-0 (out,in) in
                                  cols [0,32); rows [192,360) block-diag layer-1
    b_ref  : (TOTAL_ROWS, 1)      packed biases (same row order)
    out_ref: (1, TB)              q_tot, lane-dense
    """
    f32 = jnp.float32
    s = s_ref[...]                                        # (TB, S)

    w0t = w_ref[0:L0_ROWS, 0:STATE_DIM]                   # (192, 32)
    b0 = b_ref[0:L0_ROWS, :]                              # (192, 1)
    w1pt = w_ref[L0_ROWS:TOTAL_ROWS, :]                   # (168, 160)
    b1p = b_ref[L0_ROWS:TOTAL_ROWS, :]                    # (168, 1)

    # ---- fused layer 0: all four state-consuming heads in one MXU dot --------
    # h_all[f, b] = sum_k W0[f, k] * s[b, k] + b0[f]   (A @ B^T pattern)
    h_all = lax.dot_general(w0t, s, (((1,), (1,)), ((), ())),
                            preferred_element_type=f32) + b0          # (192, TB)
    h_relu = jnp.maximum(h_all[0:L1_IN, :], 0.0)          # [h1 ; hf ; hv]  (160, TB)
    b1 = h_all[L1_IN:L0_ROWS, :]                          # hyper_b_1(s)    (32, TB), no ReLU

    # ---- fused layer 1: block-diagonal pack of the three second layers -------
    z = jnp.dot(w1pt, h_relu, preferred_element_type=f32) + b1p       # (168, TB)
    w1 = jnp.abs(z[0:NE, :])                              # (128, TB)  |hyper_w_1(s)|
    w_final = jnp.abs(z[NE:NE + EMBED_DIM, :])            # (32, TB)   |hyper_w_final(s)|
    v = z[NE + EMBED_DIM:NE + EMBED_DIM + 1, :]           # (1, TB)    V(s)  (pad rows unread)

    # ---- mixing: hidden = ELU( bmm(agent_qs, w1) + b1 ) -----------------------
    # Sublane-only slices/broadcasts; batch stays on lanes (no lane relayout).
    hidden_lin = b1
    for a in range(N_AGENTS):                             # tiny, static trip count
        hidden_lin = hidden_lin + aq_ref[a:a + 1, :] * w1[a * EMBED_DIM:(a + 1) * EMBED_DIM, :]
    # ELU(alpha=1); clamp the dead branch so exp never produces inf.
    hidden = jnp.where(hidden_lin > 0.0, hidden_lin,
                       jnp.exp(jnp.minimum(hidden_lin, 0.0)) - 1.0)

    # ---- q_tot: sublane reduction -> naturally lane-dense (1, TB) row ---------
    out_ref[...] = jnp.sum(hidden * w_final, axis=0, keepdims=True) + v


def _round_up(x, m):
    return ((x + m - 1) // m) * m


@functools.partial(jax.jit, static_argnames=("max_tile_b",))
def qmixer_forward(agent_qs, states, w_packed, b_packed, *, max_tile_b=512):
    """agent_qs: (N, B, 1)   states: (B, STATE_DIM)   ->   q_tot: (B, 1)"""
    assert max_tile_b % 128 == 0
    # torch glue: rearrange 'N B 1 -> B 1 N' is just (N, B) with batch on lanes here.
    aq = agent_qs[:, :, 0].astype(jnp.float32)              # (N, B)
    s = states.reshape(-1, STATE_DIM).astype(jnp.float32)   # (B, S)
    B = s.shape[0]

    # batch tile: single full block for small B, 128-lane-multiple tiles otherwise
    TB = min(max_tile_b, _round_up(B, 8))
    Bp = _round_up(B, TB)
    if Bp != B:
        aq = jnp.pad(aq, ((0, 0), (0, Bp - B)))
        s = jnp.pad(s, ((0, Bp - B), (0, 0)))
    grid = (Bp // TB,)

    out = pl.pallas_call(
        _qmixer_kernel,
        out_shape=jax.ShapeDtypeStruct((1, Bp), jnp.float32),
        grid_spec=pltpu.PrefetchScalarGridSpec(
            num_scalar_prefetch=0,
            grid=grid,
            in_specs=[
                pl.BlockSpec((N_AGENTS, TB), lambda i: (0, i)),        # streamed per step
                pl.BlockSpec((TB, STATE_DIM), lambda i: (i, 0)),       # streamed per step
                pl.BlockSpec((TOTAL_ROWS, L1_IN), lambda i: (0, 0)),   # VMEM-resident weights
                pl.BlockSpec((TOTAL_ROWS, 1), lambda i: (0, 0)),       # VMEM-resident biases
            ],
            out_specs=pl.BlockSpec((1, TB), lambda i: (0, i)),         # lane-dense q_tot
        ),
        compiler_params=pltpu.CompilerParams(
            dimension_semantics=("parallel",)),   # v7x: shard batch blocks over both TCs
    )(aq, s, w_packed, b_packed)

    return out[0, :B].reshape(B, 1)


def init_params(key):
    """Deterministic synthetic parameters in torch nn.Linear layout: W=(out,in), b=(out,)."""
    ks = jax.random.split(key, 14)
    def w(k, shape):
        return (0.1 * jax.random.normal(k, shape)).astype(jnp.float32)
    w1a = w(ks[0], (HYPERNET_EMBED, STATE_DIM));  b1a = w(ks[1], (HYPERNET_EMBED,))
    w1b = w(ks[2], (NE, HYPERNET_EMBED));         b1b = w(ks[3], (NE,))
    wfa = w(ks[4], (HYPERNET_EMBED, STATE_DIM));  bfa = w(ks[5], (HYPERNET_EMBED,))
    wfb = w(ks[6], (EMBED_DIM, HYPERNET_EMBED));  bfb = w(ks[7], (EMBED_DIM,))
    wva = w(ks[8], (EMBED_DIM, STATE_DIM));       bva = w(ks[9], (EMBED_DIM,))
    wvb = w(ks[10], (1, EMBED_DIM));              bvb = w(ks[11], (1,))
    wb1 = w(ks[12], (EMBED_DIM, STATE_DIM));      bb1 = w(ks[13], (EMBED_DIM,))
    return (w1a, b1a, w1b, b1b, wfa, bfa, wfb, bfb, wva, bva, wvb, bvb, wb1, bb1)


def pack_params(params):
    """Pack the 14 tensors into one weight slab (360,160) and one bias column (360,1)."""
    (w1a, b1a, w1b, b1b, wfa, bfa, wfb, bfb, wva, bva, wvb, bvb, wb1, bb1) = params
    H, E = HYPERNET_EMBED, EMBED_DIM
    # layer 0 rows: [0,64)=hyper_w_1[0], [64,128)=hyper_w_final[0], [128,160)=V[0],
    #               [160,192)=hyper_b_1 ; all (out,in), occupying cols [0, STATE_DIM)
    w0t = jnp.concatenate([w1a, wfa, wva, wb1], axis=0)                   # (192, 32)
    b0 = jnp.concatenate([b1a, bfa, bva, bb1], axis=0)                    # (192,)
    # layer 1: block diagonal over the relu'd layer-0 features [h1 | hf | hv],
    # zero-padded from 161 to 168 rows (padded rows never read in-kernel).
    w1pt = jnp.zeros((L1_OUT_PAD, L1_IN), jnp.float32)
    w1pt = w1pt.at[0:NE, 0:H].set(w1b)                                    # -> |w1|
    w1pt = w1pt.at[NE:NE + E, H:2 * H].set(wfb)                           # -> |w_final|
    w1pt = w1pt.at[NE + E:NE + E + 1, 2 * H:2 * H + E].set(wvb)           # -> v
    b1p = jnp.zeros((L1_OUT_PAD,), jnp.float32)
    b1p = b1p.at[0:L1_OUT].set(jnp.concatenate([b1b, bfb, bvb], axis=0))

    w_packed = jnp.zeros((TOTAL_ROWS, L1_IN), jnp.float32)
    w_packed = w_packed.at[0:L0_ROWS, 0:STATE_DIM].set(w0t)
    w_packed = w_packed.at[L0_ROWS:, :].set(w1pt)
    b_packed = jnp.concatenate([b0, b1p], axis=0).reshape(TOTAL_ROWS, 1)
    return w_packed, b_packed


def qmixer_reference(agent_qs, states, params):
    """Pure-JAX reference mirroring the PyTorch forward exactly (unpacked params)."""
    (w1a, b1a, w1b, b1b, wfa, bfa, wfb, bfb, wva, bva, wvb, bvb, wb1, bb1) = params
    aq = jnp.transpose(agent_qs[:, :, 0], (1, 0)).reshape(-1, 1, N_AGENTS)   # (B,1,N)
    s = states.reshape(-1, STATE_DIM)
    bs = s.shape[0]
    h1 = jax.nn.relu(s @ w1a.T + b1a)
    w1 = jnp.abs(h1 @ w1b.T + b1b).reshape(-1, N_AGENTS, EMBED_DIM)
    b1 = (s @ wb1.T + bb1).reshape(-1, 1, EMBED_DIM)
    hidden = jax.nn.elu(jnp.einsum("bij,bjk->bik", aq, w1) + b1)
    hf = jax.nn.relu(s @ wfa.T + bfa)
    w_final = jnp.abs(hf @ wfb.T + bfb).reshape(-1, EMBED_DIM, 1)
    hv = jax.nn.relu(s @ wva.T + bva)
    v = (hv @ wvb.T + bvb).reshape(-1, 1, 1)
    y = jnp.einsum("bij,bjk->bik", hidden, w_final) + v
    return y.reshape(bs, -1)


if __name__ == "__main__":
    key = jax.random.PRNGKey(0)
    k_params, k_aq, k_s = jax.random.split(key, 3)

    params = init_params(k_params)
    w_packed, b_packed = pack_params(params)

    # torch-side layouts: agent_qs (N, B, 1), states (B, state_dim)
    agent_qs = jax.random.normal(k_aq, (N_AGENTS, BATCH, 1), dtype=jnp.float32)
    states = jax.random.normal(k_s, (BATCH, STATE_DIM), dtype=jnp.float32)

    q_tot = qmixer_forward(agent_qs, states, w_packed, b_packed)
    q_tot = jax.block_until_ready(q_tot)

    q_ref = qmixer_reference(agent_qs, states, params)
    assert q_tot.shape == (BATCH, 1), q_tot.shape
    assert jnp.allclose(q_tot, q_ref, atol=2e-4, rtol=2e-4), (
        f"max abs err {float(jnp.max(jnp.abs(q_tot - q_ref)))}")

    # exercise the batch-tiled + padded multi-block path: B=300 -> pad to 384, grid=(3,)
    k2a, k2s = jax.random.split(jax.random.PRNGKey(1))
    b2 = 300
    aq2 = jax.random.normal(k2a, (N_AGENTS, b2, 1), dtype=jnp.float32)
    s2 = jax.random.normal(k2s, (b2, STATE_DIM), dtype=jnp.float32)
    q2 = jax.block_until_ready(
        qmixer_forward(aq2, s2, w_packed, b_packed, max_tile_b=128))
    q2_ref = qmixer_reference(aq2, s2, params)
    assert q2.shape == (b2, 1), q2.shape
    assert jnp.allclose(q2, q2_ref, atol=2e-4, rtol=2e-4), (
        f"max abs err {float(jnp.max(jnp.abs(q2 - q2_ref)))}")

    print("KERNEL_OK")
</pallas_src>

<mosaic_0001>
module attributes {stable_mosaic.version = 11 : i64} {
  func.func @_qmixer_kernel(%arg0: i32, %arg1: memref<4x8xf32, #tpu.memory_space<vmem>>, %arg2: memref<8x32xf32, #tpu.memory_space<vmem>>, %arg3: memref<360x160xf32, #tpu.memory_space<vmem>>, %arg4: memref<360x1xf32, #tpu.memory_space<vmem>>, %arg5: memref<1x8xf32, #tpu.memory_space<vmem>>) attributes {dimension_semantics = [#tpu.dimension_semantics<parallel>], iteration_bounds = array<i64: 1>, scalar_prefetch = 0 : i64, scratch_operands = 0 : i64, tpu.core_type = #tpu.core_type<tc>, window_params = [{transform_indices = @transform_0, window_bounds = array<i64: 4, 8>}, {transform_indices = @transform_1, window_bounds = array<i64: 8, 32>}, {pipeline_mode = #tpu.pipeline_mode<synchronous>, transform_indices = @transform_2, window_bounds = array<i64: 360, 160>}, {pipeline_mode = #tpu.pipeline_mode<synchronous>, transform_indices = @transform_3, window_bounds = array<i64: 360, 1>}, {transform_indices = @transform_4, window_bounds = array<i64: 1, 8>}]} {
    %c0 = arith.constant 0 : index
    %c0_0 = arith.constant 0 : index
    %0 = vector.load %arg2[%c0, %c0_0] : memref<8x32xf32, #tpu.memory_space<vmem>>, vector<8x32xf32>
    %c0_1 = arith.constant 0 : index
    %c0_2 = arith.constant 0 : index
    %1 = vector.load %arg3[%c0_1, %c0_2] : memref<360x160xf32, #tpu.memory_space<vmem>>, vector<192x32xf32>
    %c0_3 = arith.constant 0 : index
    %c0_4 = arith.constant 0 : index
    %2 = vector.load %arg4[%c0_3, %c0_4] : memref<360x1xf32, #tpu.memory_space<vmem>>, vector<192x1xf32>
    %c192 = arith.constant 192 : index
    %c0_5 = arith.constant 0 : index
    %3 = vector.load %arg3[%c192, %c0_5] : memref<360x160xf32, #tpu.memory_space<vmem>>, vector<168x160xf32>
    %c192_6 = arith.constant 192 : index
    %c0_7 = arith.constant 0 : index
    %4 = vector.load %arg4[%c192_6, %c0_7] : memref<360x1xf32, #tpu.memory_space<vmem>>, vector<168x1xf32>
    %cst = arith.constant dense<0.000000e+00> : vector<192x8xf32>
    %5 = tpu.matmul %1, %0, %cst {dimension_numbers = #tpu.dot_dimension_numbers<[1], [1], [0], [0], [0, 0, 1, 0], [], []>} : vector<192x32xf32>, vector<8x32xf32>, vector<192x8xf32> -> vector<192x8xf32>
    %6 = vector.broadcast %2 : vector<192x1xf32> to vector<192x8xf32>
    %7 = arith.addf %5, %6 : vector<192x8xf32>
    %8 = vector.extract_strided_slice %7 {offsets = [0, 0], sizes = [160, 8], strides = [1, 1]} : vector<192x8xf32> to vector<160x8xf32>
    %cst_8 = arith.constant 0.000000e+00 : f32
    %9 = vector.broadcast %cst_8 : f32 to vector<160x8xf32>
    %10 = arith.maximumf %8, %9 : vector<160x8xf32>
    %11 = vector.extract_strided_slice %7 {offsets = [160, 0], sizes = [32, 8], strides = [1, 1]} : vector<192x8xf32> to vector<32x8xf32>
    %cst_9 = arith.constant dense<0.000000e+00> : vector<168x8xf32>
    %12 = tpu.matmul %3, %10, %cst_9 {dimension_numbers = #tpu.dot_dimension_numbers<[1], [0], [0], [1], [0, 0, 1, 1], [], []>} : vector<168x160xf32>, vector<160x8xf32>, vector<168x8xf32> -> vector<168x8xf32>
    %13 = vector.broadcast %4 : vector<168x1xf32> to vector<168x8xf32>
    %14 = arith.addf %12, %13 : vector<168x8xf32>
    %15 = vector.extract_strided_slice %14 {offsets = [0, 0], sizes = [128, 8], strides = [1, 1]} : vector<168x8xf32> to vector<128x8xf32>
    %16 = math.absf %15 : vector<128x8xf32>
    %17 = vector.extract_strided_slice %14 {offsets = [128, 0], sizes = [32, 8], strides = [1, 1]} : vector<168x8xf32> to vector<32x8xf32>
    %18 = math.absf %17 : vector<32x8xf32>
    %19 = vector.extract_strided_slice %14 {offsets = [160, 0], sizes = [1, 8], strides = [1, 1]} : vector<168x8xf32> to vector<1x8xf32>
    %c0_10 = arith.constant 0 : index
    %c0_11 = arith.constant 0 : index
    %20 = vector.load %arg1[%c0_10, %c0_11] : memref<4x8xf32, #tpu.memory_space<vmem>>, vector<1x8xf32>
    %21 = vector.extract_strided_slice %16 {offsets = [0, 0], sizes = [32, 8], strides = [1, 1]} : vector<128x8xf32> to vector<32x8xf32>
    %22 = vector.broadcast %20 : vector<1x8xf32> to vector<32x8xf32>
    %23 = arith.mulf %22, %21 : vector<32x8xf32>
    %24 = arith.addf %11, %23 : vector<32x8xf32>
    %c1 = arith.constant 1 : index
    %c0_12 = arith.constant 0 : index
    %25 = vector.load %arg1[%c1, %c0_12] : memref<4x8xf32, #tpu.memory_space<vmem>>, vector<1x8xf32>
    %26 = vector.extract_strided_slice %16 {offsets = [32, 0], sizes = [32, 8], strides = [1, 1]} : vector<128x8xf32> to vector<32x8xf32>
    %27 = vector.broadcast %25 : vector<1x8xf32> to vector<32x8xf32>
    %28 = arith.mulf %27, %26 : vector<32x8xf32>
    %29 = arith.addf %24, %28 : vector<32x8xf32>
    %c2 = arith.constant 2 : index
    %c0_13 = arith.constant 0 : index
    %30 = vector.load %arg1[%c2, %c0_13] : memref<4x8xf32, #tpu.memory_space<vmem>>, vector<1x8xf32>
    %31 = vector.extract_strided_slice %16 {offsets = [64, 0], sizes = [32, 8], strides = [1, 1]} : vector<128x8xf32> to vector<32x8xf32>
    %32 = vector.broadcast %30 : vector<1x8xf32> to vector<32x8xf32>
    %33 = arith.mulf %32, %31 : vector<32x8xf32>
    %34 = arith.addf %29, %33 : vector<32x8xf32>
    %c3 = arith.constant 3 : index
    %c0_14 = arith.constant 0 : index
    %35 = vector.load %arg1[%c3, %c0_14] : memref<4x8xf32, #tpu.memory_space<vmem>>, vector<1x8xf32>
    %36 = vector.extract_strided_slice %16 {offsets = [96, 0], sizes = [32, 8], strides = [1, 1]} : vector<128x8xf32> to vector<32x8xf32>
    %37 = vector.broadcast %35 : vector<1x8xf32> to vector<32x8xf32>
    %38 = arith.mulf %37, %36 : vector<32x8xf32>
    %39 = arith.addf %34, %38 : vector<32x8xf32>
    %cst_15 = arith.constant 0.000000e+00 : f32
    %40 = vector.broadcast %cst_15 : f32 to vector<32x8xf32>
    %41 = arith.cmpf ogt, %39, %40 : vector<32x8xf32>
    %cst_16 = arith.constant 0.000000e+00 : f32
    %42 = vector.broadcast %cst_16 : f32 to vector<32x8xf32>
    %43 = arith.minimumf %39, %42 : vector<32x8xf32>
    %44 = math.exp %43 : vector<32x8xf32>
    %cst_17 = arith.constant 1.000000e+00 : f32
    %45 = vector.broadcast %cst_17 : f32 to vector<32x8xf32>
    %46 = arith.subf %44, %45 : vector<32x8xf32>
    %47 = arith.select %41, %39, %46 : vector<32x8xi1>, vector<32x8xf32>
    %48 = arith.mulf %47, %18 : vector<32x8xf32>
    %cst_18 = arith.constant dense<0.000000e+00> : vector<8xf32>
    %49 = vector.multi_reduction <add>, %48, %cst_18 [0] : vector<32x8xf32> to vector<8xf32>
    %50 = vector.shape_cast %49 : vector<8xf32> to vector<1x8xf32>
    %51 = arith.addf %50, %19 : vector<1x8xf32>
    %c0_19 = arith.constant 0 : index
    %c0_20 = arith.constant 0 : index
    %52 = vector.load %arg5[%c0_19, %c0_20] : memref<1x8xf32, #tpu.memory_space<vmem>>, vector<1x8xf32>
    tpu.vector_store %arg5[%c0_19, %c0_20], %51 {strides = array<i32>} : memref<1x8xf32, #tpu.memory_space<vmem>>, vector<1x8xf32>,
    return
  }
  func.func @transform_0(%arg0: i32) -> (i32, i32) {
    %c0_i32 = arith.constant 0 : i32
    %c0_i32_0 = arith.constant 0 : i32
    return %c0_i32, %arg0 : i32, i32
  }
  func.func @transform_1(%arg0: i32) -> (i32, i32) {
    %c0_i32 = arith.constant 0 : i32
    %c0_i32_0 = arith.constant 0 : i32
    return %arg0, %c0_i32 : i32, i32
  }
  func.func @transform_2(%arg0: i32) -> (i32, i32) {
    %c0_i32 = arith.constant 0 : i32
    %c0_i32_0 = arith.constant 0 : i32
    %c0_i32_1 = arith.constant 0 : i32
    return %c0_i32, %c0_i32_0 : i32, i32
  }
  func.func @transform_3(%arg0: i32) -> (i32, i32) {
    %c0_i32 = arith.constant 0 : i32
    %c0_i32_0 = arith.constant 0 : i32
    %c0_i32_1 = arith.constant 0 : i32
    return %c0_i32, %c0_i32_0 : i32, i32
  }
  func.func @transform_4(%arg0: i32) -> (i32, i32) {
    %c0_i32 = arith.constant 0 : i32
    %c0_i32_0 = arith.constant 0 : i32
    return %c0_i32, %arg0 : i32, i32
  }
}

</mosaic_0001>

<llo_original>
// kernel: qmixer_forward.1
$region0: #{qmixer_forward.1}
  #allocation0 [shape = 'u32[]', space=smem, size = 0x4, offset = 0x4, fixed_abs, tag = 'smem constant byte address 0x4 - core index']
  #allocation1 [shape = 'u32[144,128]{1,0:T(1,128)}', space=vmem, size = 0x12000, scoped, tag = 'internal scratch']
  %s0 = inlined_call_operand.vmem [shape: f32[4,8], index: 0, kind: input, shape index: {}]
  %s1 = inlined_call_operand.vmem [shape: f32[8,32], index: 1, kind: input, shape index: {}]
  %s2 = inlined_call_operand.vmem [shape: f32[360,160], index: 2, kind: input, shape index: {}]
  %s3 = inlined_call_operand.vmem [shape: f32[360,1], index: 3, kind: input, shape index: {}]
  %s4 = inlined_call_operand.hbm [shape: f32[1,8], index: 4, kind: output, shape index: {}]
  %s5 = sld [smem:[#allocation0]]
  $region26: #{qmixer_forward.1} parent=0
    _
  %s7 = ssub.s32 1, %s5
  %s8 = scalar_select 0, %s7, %s5
  $region1: #{qmixer_forward.1} parent=0
    #allocation2 [shape = 'u8[512]{0}', space=vmem, size = 0x400, scoped, tag = 'output window, operand 0, single buffered']
    #allocation3 [shape = 's32[1]{0}', space=sflag, size = 0x4, scoped, tag = 'scoped memory for qmixer_forward.1']
    %9 = vsyncpa [#allocation3], 0
    // Predicated region
    $region2: #{qmixer_forward.1} parent=1 // pred_check
      _
    $region3: #{qmixer_forward.1} parent=1 // pred_check_branch
      %11 = sbr.rel (0) target = $region5
    $region4: #{qmixer_forward.1} parent=1 // pred_region
      _
    $region5: #{qmixer_forward.1} parent=1 // pred_fallthru
      _
    // Predicated region
    $region6: #{qmixer_forward.1} parent=1 // pred_check
      _
    $region7: #{qmixer_forward.1} parent=1 // pred_check_branch
      %13 = sbr.rel (0) target = $region9
    $region8: #{qmixer_forward.1} parent=1 // pred_region
      _
    $region9: #{qmixer_forward.1} parent=1 // pred_fallthru
      _
    // Predicated region
    $region10: #{qmixer_forward.1} parent=1 // pred_check
      _
    $region11: #{qmixer_forward.1} parent=1 // pred_check_branch
      %15 = sbr.rel (0) target = $region13
    $region12: #{qmixer_forward.1} parent=1 // pred_region
      _
    $region13: #{qmixer_forward.1} parent=1 // pred_fallthru
      _
    // Predicated region
    $region14: #{qmixer_forward.1} parent=1 // pred_check
      _
    $region15: #{qmixer_forward.1} parent=1 // pred_check_branch
      %17 = sbr.rel (0) target = $region17
    $region16: #{qmixer_forward.1} parent=1 // pred_region
      _
    $region17: #{qmixer_forward.1} parent=1 // pred_fallthru
      _
    %v18 = vld [vmem:[%s1] sm:$0xff]
    %v19 = vld [vmem:[%s2] sm:$0xff]
    %v20 = vld [vmem:[%s2 + $0x10] sm:$0xff]
    %v21 = vld [vmem:[%s2 + $0x20] sm:$0xff]
    %v22 = vld [vmem:[%s2 + $0x30] sm:$0xff]
    %v23 = vld [vmem:[%s2 + $0x40] sm:$0xff]
    %v24 = vld [vmem:[%s2 + $0x50] sm:$0xff]
    %v25 = vld [vmem:[%s2 + $0x60] sm:$0xff]
    %v26 = vld [vmem:[%s2 + $0x70] sm:$0xff]
    %v27 = vld [vmem:[%s2 + $0x80] sm:$0xff]
    %v28 = vld [vmem:[%s2 + $0x90] sm:$0xff]
    %v29 = vld [vmem:[%s2 + $0xa0] sm:$0xff]
    %v30 = vld [vmem:[%s2 + $0xb0] sm:$0xff]
    %v31 = vld [vmem:[%s2 + $0xc0] sm:$0xff]
    %v32 = vld [vmem:[%s2 + $0xd0] sm:$0xff]
    %v33 = vld [vmem:[%s2 + $0xe0] sm:$0xff]
    %v34 = vld [vmem:[%s2 + $0xf0] sm:$0xff]
    %v35 = vld [vmem:[%s2 + $0x100] sm:$0xff]
    %v36 = vld [vmem:[%s2 + $0x110] sm:$0xff]
    %v37 = vld [vmem:[%s2 + $0x120] sm:$0xff]
    %v38 = vld [vmem:[%s2 + $0x130] sm:$0xff]
    %v39 = vld [vmem:[%s2 + $0x140] sm:$0xff]
    %v40 = vld [vmem:[%s2 + $0x150] sm:$0xff]
    %v41 = vld [vmem:[%s2 + $0x160] sm:$0xff]
    %v42 = vld [vmem:[%s2 + $0x170] sm:$0xff]
    %v43 = vld [vmem:[%s3] sm:$0xff]
    %v44 = vld [vmem:[%s3 + $0x8] sm:$0xff]
    %v45 = vld [vmem:[%s3 + $0x10] sm:$0xff]
    %v46 = vld [vmem:[%s3 + $0x18] sm:$0xff]
    %v47 = vld [vmem:[%s3 + $0x20] sm:$0xff]
    %v48 = vld [vmem:[%s3 + $0x28] sm:$0xff]
    %v49 = vld [vmem:[%s3 + $0x30] sm:$0xff]
    %v50 = vld [vmem:[%s3 + $0x38] sm:$0xff]
    %v51 = vld [vmem:[%s3 + $0x40] sm:$0xff]
    %v52 = vld [vmem:[%s3 + $0x48] sm:$0xff]
    %v53 = vld [vmem:[%s3 + $0x50] sm:$0xff]
    %v54 = vld [vmem:[%s3 + $0x58] sm:$0xff]
    %v55 = vld [vmem:[%s3 + $0x60] sm:$0xff]
    %v56 = vld [vmem:[%s3 + $0x68] sm:$0xff]
    %v57 = vld [vmem:[%s3 + $0x70] sm:$0xff]
    %v58 = vld [vmem:[%s3 + $0x78] sm:$0xff]
    %v59 = vld [vmem:[%s3 + $0x80] sm:$0xff]
    %v60 = vld [vmem:[%s3 + $0x88] sm:$0xff]
    %v61 = vld [vmem:[%s3 + $0x90] sm:$0xff]
    %v62 = vld [vmem:[%s3 + $0x98] sm:$0xff]
    %v63 = vld [vmem:[%s3 + $0xa0] sm:$0xff]
    %v64 = vld [vmem:[%s3 + $0xa8] sm:$0xff]
    %v65 = vld [vmem:[%s3 + $0xb0] sm:$0xff]
    %v66 = vld [vmem:[%s3 + $0xb8] sm:$0xff]
    %v67 = vld [vmem:[%s2 + $0x180] sm:$0xff]
    %v68 = vld [vmem:[%s2 + $0x188] sm:$0xff]
    %v69 = vld [vmem:[%s2 + $0x190] sm:$0xff]
    %v70 = vld [vmem:[%s2 + $0x198] sm:$0xff]
    %v71 = vld [vmem:[%s2 + $0x1a0] sm:$0xff]
    %v72 = vld [vmem:[%s2 + $0x1a8] sm:$0xff]
    %v73 = vld [vmem:[%s2 + $0x1b0] sm:$0xff]
    %v74 = vld [vmem:[%s2 + $0x1b8] sm:$0xff]
    %v75 = vld [vmem:[%s2 + $0x1c0] sm:$0xff]
    %v76 = vld [vmem:[%s2 + $0x1c8] sm:$0xff]
    %v77 = vld [vmem:[%s2 + $0x1d0] sm:$0xff]
    %v78 = vld [vmem:[%s2 + $0x1d8] sm:$0xff]
    %v79 = vld [vmem:[%s2 + $0x1e0] sm:$0xff]
    %v80 = vld [vmem:[%s2 + $0x1e8] sm:$0xff]
    %v81 = vld [vmem:[%s2 + $0x1f0] sm:$0xff]
    %v82 = vld [vmem:[%s2 + $0x1f8] sm:$0xff]
    %v83 = vld [vmem:[%s2 + $0x200] sm:$0xff]
    %v84 = vld [vmem:[%s2 + $0x208] sm:$0xff]
    %v85 = vld [vmem:[%s2 + $0x210] sm:$0xff]
    %v86 = vld [vmem:[%s2 + $0x218] sm:$0xff]
    %v87 = vld [vmem:[%s2 + $0x220] sm:$0xff]
    %v88 = vld [vmem:[%s2 + $0x228] sm:$0xff]
    %v89 = vld [vmem:[%s2 + $0x230] sm:$0xff]
    %v90 = vld [vmem:[%s2 + $0x238] sm:$0xff]
    %v91 = vld [vmem:[%s2 + $0x240] sm:$0xff]
    %v92 = vld [vmem:[%s2 + $0x248] sm:$0xff]
    %v93 = vld [vmem:[%s2 + $0x250] sm:$0xff]
    %v94 = vld [vmem:[%s2 + $0x258] sm:$0xff]
    %v95 = vld [vmem:[%s2 + $0x260] sm:$0xff]
    %v96 = vld [vmem:[%s2 + $0x268] sm:$0xff]
    %v97 = vld [vmem:[%s2 + $0x270] sm:$0xff]
    %v98 = vld [vmem:[%s2 + $0x278] sm:$0xff]
    %v99 = vld [vmem:[%s2 + $0x280] sm:$0xff]
    %v100 = vld [vmem:[%s2 + $0x288] sm:$0xff]
    %v101 = vld [vmem:[%s2 + $0x290] sm:$0xff]
    %v102 = vld [vmem:[%s2 + $0x298] sm:$0xff]
    %v103 = vld [vmem:[%s2 + $0x2a0] sm:$0xff]
    %v104 = vld [vmem:[%s2 + $0x2a8] sm:$0xff]
    %v105 = vld [vmem:[%s2 + $0x2b0] sm:$0xff]
    %v106 = vld [vmem:[%s2 + $0x2b8] sm:$0xff]
    %v107 = vld [vmem:[%s2 + $0x2c0] sm:$0xff]
    %v108 = vld [vmem:[%s2 + $0x2c8] sm:$0xff]
    %v109 = vld [vmem:[%s3 + $0xc0] sm:$0xff]
    %v110 = vld [vmem:[%s3 + $0xc8] sm:$0xff]
    %v111 = vld [vmem:[%s3 + $0xd0] sm:$0xff]
    %v112 = vld [vmem:[%s3 + $0xd8] sm:$0xff]
    %v113 = vld [vmem:[%s3 + $0xe0] sm:$0xff]
    %v114 = vld [vmem:[%s3 + $0xe8] sm:$0xff]
    %v115 = vld [vmem:[%s3 + $0xf0] sm:$0xff]
    %v116 = vld [vmem:[%s3 + $0xf8] sm:$0xff]
    %v117 = vld [vmem:[%s3 + $0x100] sm:$0xff]
    %v118 = vld [vmem:[%s3 + $0x108] sm:$0xff]
    %v119 = vld [vmem:[%s3 + $0x110] sm:$0xff]
    %v120 = vld [vmem:[%s3 + $0x118] sm:$0xff]
    %v121 = vld [vmem:[%s3 + $0x120] sm:$0xff]
    %v122 = vld [vmem:[%s3 + $0x128] sm:$0xff]
    %v123 = vld [vmem:[%s3 + $0x130] sm:$0xff]
    %v124 = vld [vmem:[%s3 + $0x138] sm:$0xff]
    %v125 = vld [vmem:[%s3 + $0x140] sm:$0xff]
    %v126 = vld [vmem:[%s3 + $0x148] sm:$0xff]
    %v127 = vld [vmem:[%s3 + $0x150] sm:$0xff]
    %v128 = vld [vmem:[%s3 + $0x158] sm:$0xff]
    %v129 = vld [vmem:[%s3 + $0x160] sm:$0xff]
    %131 = vset.pattern.permute.xlu0 0
    %132 = vperm.xlu0 %131, %v43
    %v133 = vpop.permute.xlu0 %132
    %136 = vset.pattern.permute.xlu0 0
    %137 = vperm.xlu0 %136, %v44
    %v138 = vpop.permute.xlu0 %137
    %141 = vset.pattern.permute.xlu0 0
    %142 = vperm.xlu0 %141, %v45
    %v143 = vpop.permute.xlu0 %142
    %146 = vset.pattern.permute.xlu0 0
    %147 = vperm.xlu0 %146, %v46
    %v148 = vpop.permute.xlu0 %147
    %151 = vset.pattern.permute.xlu0 0
    %152 = vperm.xlu0 %151, %v47
    %v153 = vpop.permute.xlu0 %152
    %156 = vset.pattern.permute.xlu0 0
    %157 = vperm.xlu0 %156, %v48
    %v158 = vpop.permute.xlu0 %157
    %161 = vset.pattern.permute.xlu0 0
    %162 = vperm.xlu0 %161, %v49
    %v163 = vpop.permute.xlu0 %162
    %166 = vset.pattern.permute.xlu0 0
    %167 = vperm.xlu0 %166, %v50
    %v168 = vpop.permute.xlu0 %167
    %171 = vset.pattern.permute.xlu0 0
    %172 = vperm.xlu0 %171, %v51
    %v173 = vpop.permute.xlu0 %172
    %176 = vset.pattern.permute.xlu0 0
    %177 = vperm.xlu0 %176, %v52
    %v178 = vpop.permute.xlu0 %177
    %181 = vset.pattern.permute.xlu0 0
    %182 = vperm.xlu0 %181, %v53
    %v183 = vpop.permute.xlu0 %182
    %186 = vset.pattern.permute.xlu0 0
    %187 = vperm.xlu0 %186, %v54
    %v188 = vpop.permute.xlu0 %187
    %191 = vset.pattern.permute.xlu0 0
    %192 = vperm.xlu0 %191, %v55
    %v193 = vpop.permute.xlu0 %192
    %196 = vset.pattern.permute.xlu0 0
    %197 = vperm.xlu0 %196, %v56
    %v198 = vpop.permute.xlu0 %197
    %201 = vset.pattern.permute.xlu0 0
    %202 = vperm.xlu0 %201, %v57
    %v203 = vpop.permute.xlu0 %202
    %206 = vset.pattern.permute.xlu0 0
    %207 = vperm.xlu0 %206, %v58
    %v208 = vpop.permute.xlu0 %207
    %211 = vset.pattern.permute.xlu0 0
    %212 = vperm.xlu0 %211, %v59
    %v213 = vpop.permute.xlu0 %212
    %216 = vset.pattern.permute.xlu0 0
    %217 = vperm.xlu0 %216, %v60
    %v218 = vpop.permute.xlu0 %217
    %221 = vset.pattern.permute.xlu0 0
    %222 = vperm.xlu0 %221, %v61
    %v223 = vpop.permute.xlu0 %222
    %226 = vset.pattern.permute.xlu0 0
    %227 = vperm.xlu0 %226, %v62
    %v228 = vpop.permute.xlu0 %227
    %231 = vset.pattern.permute.xlu0 0
    %232 = vperm.xlu0 %231, %v63
    %v233 = vpop.permute.xlu0 %232
    %236 = vset.pattern.permute.xlu0 0
    %237 = vperm.xlu0 %236, %v64
    %v238 = vpop.permute.xlu0 %237
    %241 = vset.pattern.permute.xlu0 0
    %242 = vperm.xlu0 %241, %v65
    %v243 = vpop.permute.xlu0 %242
    %246 = vset.pattern.permute.xlu0 0
    %247 = vperm.xlu0 %246, %v66
    %v248 = vpop.permute.xlu0 %247
    %vm250 = vcmask 261120
    %v252 = vsel %vm250, %v19, 0
    %v255 = vsel %vm250, %v20, 0
    %v258 = vsel %vm250, %v21, 0
    %v261 = vsel %vm250, %v22, 0
    %v264 = vsel %vm250, %v23, 0
    %v267 = vsel %vm250, %v24, 0
    %v270 = vsel %vm250, %v25, 0
    %v273 = vsel %vm250, %v26, 0
    %v276 = vsel %vm250, %v27, 0
    %v279 = vsel %vm250, %v28, 0
    %v282 = vsel %vm250, %v29, 0
    %v285 = vsel %vm250, %v30, 0
    %v288 = vsel %vm250, %v31, 0
    %v291 = vsel %vm250, %v32, 0
    %v294 = vsel %vm250, %v33, 0
    %v297 = vsel %vm250, %v34, 0
    %v300 = vsel %vm250, %v35, 0
    %v303 = vsel %vm250, %v36, 0
    %v306 = vsel %vm250, %v37, 0
    %v309 = vsel %vm250, %v38, 0
    %v312 = vsel %vm250, %v39, 0
    %v315 = vsel %vm250, %v40, 0
    %v318 = vsel %vm250, %v41, 0
    %v321 = vsel %vm250, %v42, 0
    %v324 = vsel %vm250, %v18, 0
    %326 = vmatprep.subr.mxu0 0.0
    %327 = vmatpush1.xpose.msra.mxu0 %v324
    %328 = vmatprep.subr.mxu0 0.0
    %329 = vmatpush1.xpose.msra.mxu0 0.0
    %330 = vmatprep.subr.mxu0 0.0
    %331 = vmatpush1.xpose.msra.mxu0 0.0
    %332 = vmatprep.subr.mxu0 0.0
    %333 = vmatpush1.xpose.msra.mxu0 0.0
    %334 = vmatprep.subr.mxu0 0.0
    %335 = vmatpush1.xpose.msra.mxu0 0.0
    %336 = vmatprep.subr.mxu0 0.0
    %337 = vmatpush1.xpose.msra.mxu0 0.0
    %338 = vmatprep.subr.mxu0 0.0
    %339 = vmatpush1.xpose.msra.mxu0 0.0
    %340 = vmatprep.subr.mxu0 0.0
    %341 = vmatpush1.xpose.msra.mxu0 0.0
    %342 = vmatprep.subr.mxu0 0.0
    %343 = vmatpush1.xpose.msra.mxu0 0.0
    %344 = vmatprep.subr.mxu0 0.0
    %345 = vmatpush1.xpose.msra.mxu0 0.0
    %346 = vmatprep.subr.mxu0 0.0
    %347 = vmatpush1.xpose.msra.mxu0 0.0
    %348 = vmatprep.subr.mxu0 0.0
    %349 = vmatpush1.xpose.msra.mxu0 0.0
    %350 = vmatprep.subr.mxu0 0.0
    %351 = vmatpush1.xpose.msra.mxu0 0.0
    %352 = vmatprep.subr.mxu0 0.0
    %353 = vmatpush1.xpose.msra.mxu0 0.0
    %354 = vmatprep.subr.mxu0 0.0
    %355 = vmatpush1.xpose.msra.mxu0 0.0
    %356 = vmatprep.subr.mxu0 0.0
    %357 = vmatpush1.xpose.msra.mxu0 0.0
    %358 = vmatprep.subr.mxu0 0.0
    %359 = vmatpush1.xpose.msra.mxu0 0.0
    %360 = vmatprep.subr.mxu0 0.0
    %361 = vmatpush1.xpose.msra.mxu0 0.0
    %362 = vmatprep.subr.mxu0 0.0
    %363 = vmatpush1.xpose.msra.mxu0 0.0
    %364 = vmatprep.subr.mxu0 0.0
    %365 = vmatpush1.xpose.msra.mxu0 0.0
    %366 = vmatprep.subr.mxu0 0.0
    %367 = vmatpush1.xpose.msra.mxu0 0.0
    %368 = vmatprep.subr.mxu0 0.0
    %369 = vmatpush1.xpose.msra.mxu0 0.0
    %370 = vmatprep.subr.mxu0 0.0
    %371 = vmatpush1.xpose.msra.mxu0 0.0
    %372 = vmatprep.subr.mxu0 0.0
    %373 = vmatpush1.xpose.msra.mxu0 0.0
    %374 = vmatprep.subr.mxu0 0.0
    %375 = vmatpush1.xpose.msra.mxu0 0.0
    %376 = vmatprep.subr.mxu0 0.0
    %377 = vmatpush1.xpose.msra.mxu0 0.0
    %378 = vmatprep.subr.mxu0 0.0
    %379 = vmatpush1.xpose.msra.mxu0 0.0
    %380 = vmatprep.subr.mxu0 0.0
    %381 = vmatpush1.xpose.msra.mxu0 0.0
    %382 = vmatprep.subr.mxu0 0.0
    %383 = vmatpush1.xpose.msra.mxu0 0.0
    %384 = vmatprep.subr.mxu0 0.0
    %385 = vmatpush1.xpose.msra.mxu0 0.0
    %386 = vmatprep.subr.mxu0 0.0
    %387 = vmatpush1.xpose.msra.mxu0 0.0
    %388 = vmatprep.subr.mxu0 0.0
    %389 = vmatpush1.xpose.msra.mxu0 0.0
    %390 = vmatprep.mubr.f32.mxu0 0.0
    %391 = vmatmul.mubr.f32.gmra.mrb[0].mxu0 %v252
    %v392 = vpop.f32.mrb[0].mxu0
    %v393 = vadd.f32 %v133, %v392
    %v394 = vpop.f32.mrb[0].mxu0
    %395 = vmatprep.mubr.f32.mxu0 0.0
    %396 = vmatmul.mubr.f32.gmra.mrb[0].mxu0 %v255
    %v397 = vpop.f32.mrb[0].mxu0
    %v398 = vadd.f32 %v138, %v397
    %v399 = vpop.f32.mrb[0].mxu0
    %400 = vmatprep.mubr.f32.mxu0 0.0
    %401 = vmatmul.mubr.f32.gmra.mrb[0].mxu0 %v258
    %v402 = vpop.f32.mrb[0].mxu0
    %v403 = vadd.f32 %v143, %v402
    %v404 = vpop.f32.mrb[0].mxu0
    %405 = vmatprep.mubr.f32.mxu0 0.0
    %406 = vmatmul.mubr.f32.gmra.mrb[0].mxu0 %v261
    %v407 = vpop.f32.mrb[0].mxu0
    %v408 = vadd.f32 %v148, %v407
    %v409 = vpop.f32.mrb[0].mxu0
    %410 = vmatprep.mubr.f32.mxu0 0.0
    %411 = vmatmul.mubr.f32.gmra.mrb[0].mxu0 %v264
    %v412 = vpop.f32.mrb[0].mxu0
    %v413 = vadd.f32 %v153, %v412
    %v414 = vpop.f32.mrb[0].mxu0
    %415 = vmatprep.mubr.f32.mxu0 0.0
    %416 = vmatmul.mubr.f32.gmra.mrb[0].mxu0 %v267
    %v417 = vpop.f32.mrb[0].mxu0
    %v418 = vadd.f32 %v158, %v417
    %v419 = vpop.f32.mrb[0].mxu0
    %420 = vmatprep.mubr.f32.mxu0 0.0
    %421 = vmatmul.mubr.f32.gmra.mrb[0].mxu0 %v270
    %v422 = vpop.f32.mrb[0].mxu0
    %v423 = vadd.f32 %v163, %v422
    %v424 = vpop.f32.mrb[0].mxu0
    %425 = vmatprep.mubr.f32.mxu0 0.0
    %426 = vmatmul.mubr.f32.gmra.mrb[0].mxu0 %v273
    %v427 = vpop.f32.mrb[0].mxu0
    %v428 = vadd.f32 %v168, %v427
    %v429 = vpop.f32.mrb[0].mxu0
    %430 = vmatprep.mubr.f32.mxu0 0.0
    %431 = vmatmul.mubr.f32.gmra.mrb[0].mxu0 %v276
    %v432 = vpop.f32.mrb[0].mxu0
    %v433 = vadd.f32 %v173, %v432
    %v434 = vpop.f32.mrb[0].mxu0
    %435 = vmatprep.mubr.f32.mxu0 0.0
    %436 = vmatmul.mubr.f32.gmra.mrb[0].mxu0 %v279
    %v437 = vpop.f32.mrb[0].mxu0
    %v438 = vadd.f32 %v178, %v437
    %v439 = vpop.f32.mrb[0].mxu0
    %440 = vmatprep.mubr.f32.mxu0 0.0
    %441 = vmatmul.mubr.f32.gmra.mrb[0].mxu0 %v282
    %v442 = vpop.f32.mrb[0].mxu0
    %v443 = vadd.f32 %v183, %v442
    %v444 = vpop.f32.mrb[0].mxu0
    %445 = vmatprep.mubr.f32.mxu0 0.0
    %446 = vmatmul.mubr.f32.gmra.mrb[0].mxu0 %v285
    %v447 = vpop.f32.mrb[0].mxu0
    %v448 = vadd.f32 %v188, %v447
    %v449 = vpop.f32.mrb[0].mxu0
    %450 = vmatprep.mubr.f32.mxu0 0.0
    %451 = vmatmul.mubr.f32.gmra.mrb[0].mxu0 %v288
    %v452 = vpop.f32.mrb[0].mxu0
    %v453 = vadd.f32 %v193, %v452
    %v454 = vpop.f32.mrb[0].mxu0
    %455 = vmatprep.mubr.f32.mxu0 0.0
    %456 = vmatmul.mubr.f32.gmra.mrb[0].mxu0 %v291
    %v457 = vpop.f32.mrb[0].mxu0
    %v458 = vadd.f32 %v198, %v457
    %v459 = vpop.f32.mrb[0].mxu0
    %460 = vmatprep.mubr.f32.mxu0 0.0
    %461 = vmatmul.mubr.f32.gmra.mrb[0].mxu0 %v294
    %v462 = vpop.f32.mrb[0].mxu0
    %v463 = vadd.f32 %v203, %v462
    %v464 = vpop.f32.mrb[0].mxu0
    %465 = vmatprep.mubr.f32.mxu0 0.0
    %466 = vmatmul.mubr.f32.gmra.mrb[0].mxu0 %v297
    %v467 = vpop.f32.mrb[0].mxu0
    %v468 = vadd.f32 %v208, %v467
    %v469 = vpop.f32.mrb[0].mxu0
    %470 = vmatprep.mubr.f32.mxu0 0.0
    %471 = vmatmul.mubr.f32.gmra.mrb[0].mxu0 %v300
    %v472 = vpop.f32.mrb[0].mxu0
    %v473 = vadd.f32 %v213, %v472
    %v474 = vpop.f32.mrb[0].mxu0
    %475 = vmatprep.mubr.f32.mxu0 0.0
    %476 = vmatmul.mubr.f32.gmra.mrb[0].mxu0 %v303
    %v477 = vpop.f32.mrb[0].mxu0
    %v478 = vadd.f32 %v218, %v477
    %v479 = vpop.f32.mrb[0].mxu0
    %480 = vmatprep.mubr.f32.mxu0 0.0
    %481 = vmatmul.mubr.f32.gmra.mrb[0].mxu0 %v306
    %v482 = vpop.f32.mrb[0].mxu0
    %v483 = vadd.f32 %v223, %v482
    %v484 = vpop.f32.mrb[0].mxu0
    %485 = vmatprep.mubr.f32.mxu0 0.0
    %486 = vmatmul.mubr.f32.gmra.mrb[0].mxu0 %v309
    %v487 = vpop.f32.mrb[0].mxu0
    %v488 = vadd.f32 %v228, %v487
    %v489 = vpop.f32.mrb[0].mxu0
    %490 = vmatprep.mubr.f32.mxu0 0.0
    %491 = vmatmul.mubr.f32.gmra.mrb[0].mxu0 %v312
    %v492 = vpop.f32.mrb[0].mxu0
    %v493 = vadd.f32 %v233, %v492
    %v494 = vpop.f32.mrb[0].mxu0
    %495 = vmatprep.mubr.f32.mxu0 0.0
    %496 = vmatmul.mubr.f32.gmra.mrb[0].mxu0 %v315
    %v497 = vpop.f32.mrb[0].mxu0
    %v498 = vadd.f32 %v238, %v497
    %v499 = vpop.f32.mrb[0].mxu0
    %500 = vmatprep.mubr.f32.mxu0 0.0
    %501 = vmatmul.mubr.f32.gmra.mrb[0].mxu0 %v318
    %v502 = vpop.f32.mrb[0].mxu0
    %v503 = vadd.f32 %v243, %v502
    %v504 = vpop.f32.mrb[0].mxu0
    %505 = vmatprep.mubr.f32.mxu0 0.0
    %506 = vmatmul.mubr.f32.gmra.mrb[0].mxu0 %v321
    %v507 = vpop.f32.mrb[0].mxu0
    %v508 = vadd.f32 %v248, %v507
    %v509 = vpop.f32.mrb[0].mxu0
    %510 = vdwg.mxu0
    %v511 = vmax.f32 %v393, 0.0
    %v512 = vmax.f32 %v398, 0.0
    %v513 = vmax.f32 %v403, 0.0
    %v514 = vmax.f32 %v408, 0.0
    %v515 = vmax.f32 %v413, 0.0
    %v516 = vmax.f32 %v418, 0.0
    %v517 = vmax.f32 %v423, 0.0
    %v518 = vmax.f32 %v428, 0.0
    %v519 = vmax.f32 %v433, 0.0
    %v520 = vmax.f32 %v438, 0.0
    %v521 = vmax.f32 %v443, 0.0
    %v522 = vmax.f32 %v448, 0.0
    %v523 = vmax.f32 %v453, 0.0
    %v524 = vmax.f32 %v458, 0.0
    %v525 = vmax.f32 %v463, 0.0
    %v526 = vmax.f32 %v468, 0.0
    %v527 = vmax.f32 %v473, 0.0
    %v528 = vmax.f32 %v478, 0.0
    %v529 = vmax.f32 %v483, 0.0
    %v530 = vmax.f32 %v488, 0.0
    %532 = vset.pattern.permute.xlu0 0
    %533 = vperm.xlu0 %532, %v109
    %v534 = vpop.permute.xlu0 %533
    %537 = vset.pattern.permute.xlu0 0
    %538 = vperm.xlu0 %537, %v110
    %v539 = vpop.permute.xlu0 %538
    %542 = vset.pattern.permute.xlu0 0
    %543 = vperm.xlu0 %542, %v111
    %v544 = vpop.permute.xlu0 %543
    %547 = vset.pattern.permute.xlu0 0
    %548 = vperm.xlu0 %547, %v112
    %v549 = vpop.permute.xlu0 %548
    %552 = vset.pattern.permute.xlu0 0
    %553 = vperm.xlu0 %552, %v113
    %v554 = vpop.permute.xlu0 %553
    %557 = vset.pattern.permute.xlu0 0
    %558 = vperm.xlu0 %557, %v114
    %v559 = vpop.permute.xlu0 %558
    %562 = vset.pattern.permute.xlu0 0
    %563 = vperm.xlu0 %562, %v115
    %v564 = vpop.permute.xlu0 %563
    %567 = vset.pattern.permute.xlu0 0
    %568 = vperm.xlu0 %567, %v116
    %v569 = vpop.permute.xlu0 %568
    %572 = vset.pattern.permute.xlu0 0
    %573 = vperm.xlu0 %572, %v117
    %v574 = vpop.permute.xlu0 %573
    %577 = vset.pattern.permute.xlu0 0
    %578 = vperm.xlu0 %577, %v118
    %v579 = vpop.permute.xlu0 %578
    %582 = vset.pattern.permute.xlu0 0
    %583 = vperm.xlu0 %582, %v119
    %v584 = vpop.permute.xlu0 %583
    %587 = vset.pattern.permute.xlu0 0
    %588 = vperm.xlu0 %587, %v120
    %v589 = vpop.permute.xlu0 %588
    %592 = vset.pattern.permute.xlu0 0
    %593 = vperm.xlu0 %592, %v121
    %v594 = vpop.permute.xlu0 %593
    %597 = vset.pattern.permute.xlu0 0
    %598 = vperm.xlu0 %597, %v122
    %v599 = vpop.permute.xlu0 %598
    %602 = vset.pattern.permute.xlu0 0
    %603 = vperm.xlu0 %602, %v123
    %v604 = vpop.permute.xlu0 %603
    %607 = vset.pattern.permute.xlu0 0
    %608 = vperm.xlu0 %607, %v124
    %v609 = vpop.permute.xlu0 %608
    %612 = vset.pattern.permute.xlu0 0
    %613 = vperm.xlu0 %612, %v125
    %v614 = vpop.permute.xlu0 %613
    %617 = vset.pattern.permute.xlu0 0
    %618 = vperm.xlu0 %617, %v126
    %v619 = vpop.permute.xlu0 %618
    %622 = vset.pattern.permute.xlu0 0
    %623 = vperm.xlu0 %622, %v127
    %v624 = vpop.permute.xlu0 %623
    %627 = vset.pattern.permute.xlu0 0
    %628 = vperm.xlu0 %627, %v128
    %v629 = vpop.permute.xlu0 %628
    %632 = vset.pattern.permute.xlu0 0
    %633 = vperm.xlu0 %632, %v129
    %v634 = vpop.permute.xlu0 %633
    %v637 = vsel %vm250, %v68, 0
    %v640 = vsel %vm250, %v70, 0
    %v643 = vsel %vm250, %v72, 0
    %v646 = vsel %vm250, %v74, 0
    %v649 = vsel %vm250, %v76, 0
    %v652 = vsel %vm250, %v78, 0
    %v655 = vsel %vm250, %v80, 0
    %v658 = vsel %vm250, %v82, 0
    %v661 = vsel %vm250, %v84, 0
    %v664 = vsel %vm250, %v86, 0
    %v667 = vsel %vm250, %v88, 0
    %v670 = vsel %vm250, %v90, 0
    %v673 = vsel %vm250, %v92, 0
    %v676 = vsel %vm250, %v94, 0
    %v679 = vsel %vm250, %v96, 0
    %v682 = vsel %vm250, %v98, 0
    %v685 = vsel %vm250, %v100, 0
    %v688 = vsel %vm250, %v102, 0
    %v691 = vsel %vm250, %v104, 0
    %v694 = vsel %vm250, %v106, 0
    %v697 = vsel %vm250, %v108, 0
    %699 = vmatprep.subr.mxu0 0.0
    %700 = vmatpush1.msra.mxu0 %v511
    %701 = vmatprep.subr.mxu0 0.0
    %702 = vmatpush1.msra.mxu0 %v512
    %703 = vmatprep.subr.mxu0 0.0
    %704 = vmatpush1.msra.mxu0 %v513
    %705 = vmatprep.subr.mxu0 0.0
    %706 = vmatpush1.msra.mxu0 %v514
    %707 = vmatprep.subr.mxu0 0.0
    %708 = vmatpush1.msra.mxu0 %v515
    %709 = vmatprep.subr.mxu0 0.0
    %710 = vmatpush1.msra.mxu0 %v516
    %711 = vmatprep.subr.mxu0 0.0
    %712 = vmatpush1.msra.mxu0 %v517
    %713 = vmatprep.subr.mxu0 0.0
    %714 = vmatpush1.msra.mxu0 %v518
    %715 = vmatprep.subr.mxu0 0.0
    %716 = vmatpush1.msra.mxu0 %v519
    %717 = vmatprep.subr.mxu0 0.0
    %718 = vmatpush1.msra.mxu0 %v520
    %719 = vmatprep.subr.mxu0 0.0
    %720 = vmatpush1.msra.mxu0 %v521
    %721 = vmatprep.subr.mxu0 0.0
    %722 = vmatpush1.msra.mxu0 %v522
    %723 = vmatprep.subr.mxu0 0.0
    %724 = vmatpush1.msra.mxu0 %v523
    %725 = vmatprep.subr.mxu0 0.0
    %726 = vmatpush1.msra.mxu0 %v524
    %727 = vmatprep.subr.mxu0 0.0
    %728 = vmatpush1.msra.mxu0 %v525
    %729 = vmatprep.subr.mxu0 0.0
    %730 = vmatpush1.msra.mxu0 %v526
    %731 = vmatprep.subr.mxu0 0.0
    %732 = vmatpush1.msra.mxu0 %v527
    %733 = vmatprep.subr.mxu0 0.0
    %734 = vmatpush1.msra.mxu0 %v528
    %735 = vmatprep.subr.mxu0 0.0
    %736 = vmatpush1.msra.mxu0 %v529
    %737 = vmatprep.subr.mxu0 0.0
    %738 = vmatpush1.msra.mxu0 %v530
    %739 = vmatprep.subr.mxu0 0.0
    %740 = vmatpush1.msra.mxu0 0.0
    %741 = vmatprep.subr.mxu0 0.0
    %742 = vmatpush1.msra.mxu0 0.0
    %743 = vmatprep.subr.mxu0 0.0
    %744 = vmatpush1.msra.mxu0 0.0
    %745 = vmatprep.subr.mxu0 0.0
    %746 = vmatpush1.msra.mxu0 0.0
    %747 = vmatprep.subr.mxu0 0.0
    %748 = vmatpush1.msra.mxu0 0.0
    %749 = vmatprep.subr.mxu0 0.0
    %750 = vmatpush1.msra.mxu0 0.0
    %751 = vmatprep.subr.mxu0 0.0
    %752 = vmatpush1.msra.mxu0 0.0
    %753 = vmatprep.subr.mxu0 0.0
    %754 = vmatpush1.msra.mxu0 0.0
    %755 = vmatprep.subr.mxu0 0.0
    %756 = vmatpush1.msra.mxu0 0.0
    %757 = vmatprep.subr.mxu0 0.0
    %758 = vmatpush1.msra.mxu0 0.0
    %759 = vmatprep.subr.mxu0 0.0
    %760 = vmatpush1.msra.mxu0 0.0
    %761 = vmatprep.subr.mxu0 0.0
    %762 = vmatpush1.msra.mxu0 0.0
    %763 = vmatprep.mubr.f32.mxu0 %v637
    %764 = vmatmul.mubr.f32.gmra.mrb[0].mxu0 %v67
    %v765 = vpop.f32.mrb[0].mxu0
    %v766 = vadd.f32 %v534, %v765
    %v767 = vpop.f32.mrb[0].mxu0
    %768 = vmatprep.mubr.f32.mxu0 %v640
    %769 = vmatmul.mubr.f32.gmra.mrb[0].mxu0 %v69
    %v770 = vpop.f32.mrb[0].mxu0
    %v771 = vadd.f32 %v539, %v770
    %v772 = vpop.f32.mrb[0].mxu0
    %773 = vmatprep.mubr.f32.mxu0 %v643
    %774 = vmatmul.mubr.f32.gmra.mrb[0].mxu0 %v71
    %v775 = vpop.f32.mrb[0].mxu0
    %v776 = vadd.f32 %v544, %v775
    %v777 = vpop.f32.mrb[0].mxu0
    %778 = vmatprep.mubr.f32.mxu0 %v646
    %779 = vmatmul.mubr.f32.gmra.mrb[0].mxu0 %v73
    %v780 = vpop.f32.mrb[0].mxu0
    %v781 = vadd.f32 %v549, %v780
    %v782 = vpop.f32.mrb[0].mxu0
    %783 = vmatprep.mubr.f32.mxu0 %v649
    %784 = vmatmul.mubr.f32.gmra.mrb[0].mxu0 %v75
    %v785 = vpop.f32.mrb[0].mxu0
    %v786 = vadd.f32 %v554, %v785
    %v787 = vpop.f32.mrb[0].mxu0
    %788 = vmatprep.mubr.f32.mxu0 %v652
    %789 = vmatmul.mubr.f32.gmra.mrb[0].mxu0 %v77
    %v790 = vpop.f32.mrb[0].mxu0
    %v791 = vadd.f32 %v559, %v790
    %v792 = vpop.f32.mrb[0].mxu0
    %793 = vmatprep.mubr.f32.mxu0 %v655
    %794 = vmatmul.mubr.f32.gmra.mrb[0].mxu0 %v79
    %v795 = vpop.f32.mrb[0].mxu0
    %v796 = vadd.f32 %v564, %v795
    %v797 = vpop.f32.mrb[0].mxu0
    %798 = vmatprep.mubr.f32.mxu0 %v658
    %799 = vmatmul.mubr.f32.gmra.mrb[0].mxu0 %v81
    %v800 = vpop.f32.mrb[0].mxu0
    %v801 = vadd.f32 %v569, %v800
    %v802 = vpop.f32.mrb[0].mxu0
    %803 = vmatprep.mubr.f32.mxu0 %v661
    %804 = vmatmul.mubr.f32.gmra.mrb[0].mxu0 %v83
    %v805 = vpop.f32.mrb[0].mxu0
    %v806 = vadd.f32 %v574, %v805
    %v807 = vpop.f32.mrb[0].mxu0
    %808 = vmatprep.mubr.f32.mxu0 %v664
    %809 = vmatmul.mubr.f32.gmra.mrb[0].mxu0 %v85
    %v810 = vpop.f32.mrb[0].mxu0
    %v811 = vadd.f32 %v579, %v810
    %v812 = vpop.f32.mrb[0].mxu0
    %813 = vmatprep.mubr.f32.mxu0 %v667
    %814 = vmatmul.mubr.f32.gmra.mrb[0].mxu0 %v87
    %v815 = vpop.f32.mrb[0].mxu0
    %v816 = vadd.f32 %v584, %v815
    %v817 = vpop.f32.mrb[0].mxu0
    %818 = vmatprep.mubr.f32.mxu0 %v670
    %819 = vmatmul.mubr.f32.gmra.mrb[0].mxu0 %v89
    %v820 = vpop.f32.mrb[0].mxu0
    %v821 = vadd.f32 %v589, %v820
    %v822 = vpop.f32.mrb[0].mxu0
    %823 = vmatprep.mubr.f32.mxu0 %v673
    %824 = vmatmul.mubr.f32.gmra.mrb[0].mxu0 %v91
    %v825 = vpop.f32.mrb[0].mxu0
    %v826 = vadd.f32 %v594, %v825
    %v827 = vpop.f32.mrb[0].mxu0
    %828 = vmatprep.mubr.f32.mxu0 %v676
    %829 = vmatmul.mubr.f32.gmra.mrb[0].mxu0 %v93
    %v830 = vpop.f32.mrb[0].mxu0
    %v831 = vadd.f32 %v599, %v830
    %v832 = vpop.f32.mrb[0].mxu0
    %833 = vmatprep.mubr.f32.mxu0 %v679
    %834 = vmatmul.mubr.f32.gmra.mrb[0].mxu0 %v95
    %v835 = vpop.f32.mrb[0].mxu0
    %v836 = vadd.f32 %v604, %v835
    %v837 = vpop.f32.mrb[0].mxu0
    %838 = vmatprep.mubr.f32.mxu0 %v682
    %839 = vmatmul.mubr.f32.gmra.mrb[0].mxu0 %v97
    %v840 = vpop.f32.mrb[0].mxu0
    %v841 = vadd.f32 %v609, %v840
    %v842 = vpop.f32.mrb[0].mxu0
    %843 = vmatprep.mubr.f32.mxu0 %v685
    %844 = vmatmul.mubr.f32.gmra.mrb[0].mxu0 %v99
    %v845 = vpop.f32.mrb[0].mxu0
    %v846 = vadd.f32 %v614, %v845
    %v847 = vpop.f32.mrb[0].mxu0
    %848 = vmatprep.mubr.f32.mxu0 %v688
    %849 = vmatmul.mubr.f32.gmra.mrb[0].mxu0 %v101
    %v850 = vpop.f32.mrb[0].mxu0
    %v851 = vadd.f32 %v619, %v850
    %v852 = vpop.f32.mrb[0].mxu0
    %853 = vmatprep.mubr.f32.mxu0 %v691
    %854 = vmatmul.mubr.f32.gmra.mrb[0].mxu0 %v103
    %v855 = vpop.f32.mrb[0].mxu0
    %v856 = vadd.f32 %v624, %v855
    %v857 = vpop.f32.mrb[0].mxu0
    %858 = vmatprep.mubr.f32.mxu0 %v694
    %859 = vmatmul.mubr.f32.gmra.mrb[0].mxu0 %v105
    %v860 = vpop.f32.mrb[0].mxu0
    %v861 = vadd.f32 %v629, %v860
    %v862 = vpop.f32.mrb[0].mxu0
    %863 = vmatprep.mubr.f32.mxu0 %v697
    %864 = vmatmul.mubr.f32.gmra.mrb[0].mxu0 %v107
    %v865 = vpop.f32.mrb[0].mxu0
    %v866 = vadd.f32 %v634, %v865
    %v867 = vpop.f32.mrb[0].mxu0
    %868 = vdwg.mxu0
    %v869 = vand.u32 2147483647, %v766
    %v870 = vand.u32 2147483647, %v771
    %v871 = vand.u32 2147483647, %v776
    %v872 = vand.u32 2147483647, %v781
    %v873 = vand.u32 2147483647, %v786
    %v874 = vand.u32 2147483647, %v791
    %v875 = vand.u32 2147483647, %v796
    %v876 = vand.u32 2147483647, %v801
    %v877 = vand.u32 2147483647, %v806
    %v878 = vand.u32 2147483647, %v811
    %v879 = vand.u32 2147483647, %v816
    %v880 = vand.u32 2147483647, %v821
    %v881 = vand.u32 2147483647, %v826
    %v882 = vand.u32 2147483647, %v831
    %v883 = vand.u32 2147483647, %v836
    %v884 = vand.u32 2147483647, %v841
    %v885 = vand.u32 2147483647, %v846
    %v886 = vand.u32 2147483647, %v851
    %v887 = vand.u32 2147483647, %v856
    %v888 = vand.u32 2147483647, %v861
    %v889 = vld [vmem:[%s0] sm:$0x1]
    %v890 = vlaneseq
    %v891 = vshrl.u32 %v890, 7
    %v892 = vsub.s32 0, %v891
    %v893 = vrot.slane %v889, %v892
    %v894 = vmul.f32 %v893, %v869
    %v895 = vmul.f32 %v893, %v870
    %v896 = vmul.f32 %v893, %v871
    %v897 = vmul.f32 %v893, %v872
    %v898 = vadd.f32 %v493, %v894
    %v899 = vadd.f32 %v498, %v895
    %v900 = vadd.f32 %v503, %v896
    %v901 = vadd.f32 %v508, %v897
    %v902 = vld [vmem:[%s0 + $0x1] sm:$0x1]
    %v903 = vlaneseq
    %v904 = vshrl.u32 %v903, 7
    %v905 = vsub.s32 0, %v904
    %v906 = vrot.slane %v902, %v905
    %v907 = vmul.f32 %v906, %v873
    %v908 = vmul.f32 %v906, %v874
    %v909 = vmul.f32 %v906, %v875
    %v910 = vmul.f32 %v906, %v876
    %v911 = vadd.f32 %v898, %v907
    %v912 = vadd.f32 %v899, %v908
    %v913 = vadd.f32 %v900, %v909
    %v914 = vadd.f32 %v901, %v910
    %v915 = vld [vmem:[%s0 + $0x2] sm:$0x1]
    %v916 = vlaneseq
    %v917 = vshrl.u32 %v916, 7
    %v918 = vsub.s32 0, %v917
    %v919 = vrot.slane %v915, %v918
    %v920 = vmul.f32 %v919, %v877
    %v921 = vmul.f32 %v919, %v878
    %v922 = vmul.f32 %v919, %v879
    %v923 = vmul.f32 %v919, %v880
    %v924 = vadd.f32 %v911, %v920
    %v925 = vadd.f32 %v912, %v921
    %v926 = vadd.f32 %v913, %v922
    %v927 = vadd.f32 %v914, %v923
    %v928 = vld [vmem:[%s0 + $0x3] sm:$0x1]
    %v929 = vlaneseq
    %v930 = vshrl.u32 %v929, 7
    %v931 = vsub.s32 0, %v930
    %v932 = vrot.slane %v928, %v931
    %v933 = vmul.f32 %v932, %v881
    %v934 = vmul.f32 %v932, %v882
    %v935 = vmul.f32 %v932, %v883
    %v936 = vmul.f32 %v932, %v884
    %v937 = vadd.f32 %v924, %v933
    %v938 = vadd.f32 %v925, %v934
    %v939 = vadd.f32 %v926, %v935
    %v940 = vadd.f32 %v927, %v936
    %vm941 = vcmp.gt.f32.partialorder %v937, 0.0
    %vm942 = vcmp.gt.f32.partialorder %v938, 0.0
    %vm943 = vcmp.gt.f32.partialorder %v939, 0.0
    %vm944 = vcmp.gt.f32.partialorder %v940, 0.0
    %v945 = vmin.f32 %v937, 0.0
    %v946 = vmin.f32 %v938, 0.0
    %v947 = vmin.f32 %v939, 0.0
    %v948 = vmin.f32 %v940, 0.0
    %v949 = vmul.f32 %v945, 1.442695
    %v950 = vpow.pop %v949
    %v951 = vmul.f32 %v946, 1.442695
    %v952 = vpow.pop %v951
    %v953 = vmul.f32 %v947, 1.442695
    %v954 = vpow.pop %v953
    %v955 = vmul.f32 %v948, 1.442695
    %v956 = vpow.pop %v955
    %v957 = vsub.f32 %v950, 1.0
    %v958 = vsub.f32 %v952, 1.0
    %v959 = vsub.f32 %v954, 1.0
    %v960 = vsub.f32 %v956, 1.0
    %v961 = vsel %vm941, %v937, %v957
    %v962 = vsel %vm942, %v938, %v958
    %v963 = vsel %vm943, %v939, %v959
    %v964 = vsel %vm944, %v940, %v960
    %v965 = vmul.f32 %v961, %v885
    %v966 = vmul.f32 %v962, %v886
    %v967 = vmul.f32 %v963, %v887
    %v968 = vmul.f32 %v964, %v888
    %vm969 = vcmask 64512
    %v970 = vsel %vm969, %v965, 0.0
    %v971 = vsel %vm969, %v966, 0.0
    %v972 = vadd.f32 %v970, %v971
    %v973 = vsel %vm969, %v967, 0.0
    %v974 = vadd.f32 %v972, %v973
    %v975 = vsel %vm969, %v968, 0.0
    %v976 = vadd.f32 %v974, %v975
    %v977 = vrot.slane %v976, 4
    %v978 = vadd.f32 %v976, %v977
    %v979 = vrot.slane %v978, 2
    %v980 = vadd.f32 %v978, %v979
    %v981 = vrot.slane %v980, 1
    %v982 = vadd.f32 %v980, %v981
    %v983 = vadd.f32 %v982, %v866
    %vm984 = vcmask 57344
    %985 = vst.msk [vmem:[#allocation2] sm:$0x1] %vm984, %v983
    // Predicated region
    $region18: #{qmixer_forward.1} parent=1 // pred_check
      _
    $region19: #{qmixer_forward.1} parent=1 // pred_check_branch
      %987 = sbr.rel (0) target = $region21
    $region20: #{qmixer_forward.1} parent=1 // pred_region
      %s989 = ssub.s32 16, 16
      %990 = vsyncadd [#allocation3], %s989
      %s992 = sshll.u32 [#allocation2], 4
      %s993 = int_to_ptr.vmem [resolvable:$true] %s992
      %995 = dma.vmem_to_hbm [thread:$0]  %s993, 16, %s4, [#allocation3]
    $region21: #{qmixer_forward.1} parent=1 // pred_fallthru
      _
    // Predicated region
    $region22: #{qmixer_forward.1} parent=1 // pred_check
      _
    $region23: #{qmixer_forward.1} parent=1 // pred_check_branch
      %997 = sbr.rel (0) target = $region25
    $region24: #{qmixer_forward.1} parent=1 // pred_region
      %998 = dma.done [#allocation3], 16
    $region25: #{qmixer_forward.1} parent=1 // pred_fallthru
      _
    %999 = vsyncpa [#allocation3], 1

</llo_original>
